<compile_context>
chip_gen: v6e
topology: v6e:2x2x1
jax: 0.10.0
libtpu: 0.0.40
codegen_flags: <defaults>
</compile_context>

<pallas_src>
import functools

import jax
import jax.numpy as jnp
from jax.experimental import pallas as pl
from jax.experimental.pallas import tpu as pltpu


def _residual_kernel(x_ref, w_ref, gamma_ref, beta_ref, out_ref, *,
                     o_features, tile_n):
    """One output-column tile of cat([relu(bn(x @ W)), x], dim=1).

    w_ref holds a tile of the augmented weight [W | I], so the last I columns
    of the full output reproduce x exactly via the same matmul; the whole tile
    is written with one full-block store.
    """
    x = x_ref[...]                                            # [B, I]  f32
    w = w_ref[...]                                            # [I, TN] f32

    # Linear. Bias intentionally omitted: training-mode BatchNorm subtracts
    # the per-column batch mean, which cancels any per-column constant.
    h = jnp.dot(x, w, preferred_element_type=jnp.float32)     # [B, TN]

    # Single-pass BatchNorm1d (training) statistics.
    n = h.shape[0]
    inv_n = jnp.float32(1.0 / n)
    mean = jnp.sum(h, axis=0, keepdims=True) * inv_n          # [1, TN]
    msq = jnp.sum(h * h, axis=0, keepdims=True) * inv_n       # [1, TN]
    var = jnp.maximum(msq - mean * mean, 0.0)                 # guard cancellation
    inv_std = jax.lax.rsqrt(var + jnp.float32(1e-5))

    # Fused affine epilogue: y = h * scale + shift.
    scale = gamma_ref[...] * inv_std                          # [1, TN]
    shift = beta_ref[...] - mean * scale                      # [1, TN]
    y = h * scale + shift                                     # [B, TN]

    # Columns >= o_features are the residual pass-through (h == x there via
    # the identity block): keep raw h, apply ReLU only to BN'd columns.
    col0 = pl.program_id(0) * tile_n
    col = col0 + jax.lax.broadcasted_iota(jnp.int32, h.shape, 1)
    out_ref[...] = jnp.where(col < o_features,
                             jnp.maximum(y, 0.0), h).astype(out_ref.dtype)


def residual_forward(x, w, b=None, gamma=None, beta=None):
    """Pallas-backed forward of the CTGAN Residual layer.

    x:     [B, I] float32
    w:     [I, O] float32  (transposed vs. torch Linear.weight [O, I])
    b:     [O]    float32  (accepted for interface parity; mathematically a
                            no-op under training-mode BatchNorm, so unused)
    gamma: [O]    float32  (BatchNorm weight)
    beta:  [O]    float32  (BatchNorm bias)
    returns [B, O + I] float32 == cat([relu(bn(fc(x))), x], dim=1)
    """
    x = x.astype(jnp.float32)
    w = w.astype(jnp.float32)
    B, I = x.shape
    O = w.shape[1]
    OW = O + I

    if gamma is None:
        gamma = jnp.ones((O,), jnp.float32)
    if beta is None:
        beta = jnp.zeros((O,), jnp.float32)
    del b  # exactly cancelled by the BN mean subtraction

    # Augment the weight so the last I output columns reproduce x; this lets
    # the kernel emit the fused concat [bn_relu | x] in a single store.
    w_aug = jnp.concatenate([w, jnp.eye(I, dtype=jnp.float32)], axis=1)  # [I, OW]
    gamma_aug = jnp.concatenate(
        [gamma.astype(jnp.float32), jnp.ones((I,), jnp.float32)]).reshape(1, OW)
    beta_aug = jnp.concatenate(
        [beta.astype(jnp.float32), jnp.zeros((I,), jnp.float32)]).reshape(1, OW)

    # Output-column tiling. BN stats are per-column, so tiling O is exact
    # (never tile B!). Large layers get a parallel grid (v7x megacore + VMEM
    # bounding); small layers use one full-width block.
    if OW % 256 == 0 and OW > 256:
        tn = 256
    elif OW % 128 == 0 and OW > 128:
        tn = 128
    else:
        tn = OW
    grid = (OW // tn,)

    kernel = functools.partial(_residual_kernel, o_features=O, tile_n=tn)

    return pl.pallas_call(
        kernel,
        out_shape=jax.ShapeDtypeStruct((B, OW), jnp.float32),
        grid=grid,
        in_specs=[
            pl.BlockSpec((B, I), lambda j: (0, 0)),   # x (full batch, resident)
            pl.BlockSpec((I, tn), lambda j: (0, j)),  # W_aug column tile
            pl.BlockSpec((1, tn), lambda j: (0, j)),  # gamma tile
            pl.BlockSpec((1, tn), lambda j: (0, j)),  # beta tile
        ],
        out_specs=pl.BlockSpec((B, tn), lambda j: (0, j)),
        compiler_params=pltpu.CompilerParams(
            dimension_semantics=("parallel",),
        ),
    )(x, w_aug, gamma_aug, beta_aug)


def _reference_forward(x, w, b, gamma, beta):
    """Pure-JAX reference matching PyTorch training-mode forward."""
    h = x @ w + b
    mean = jnp.mean(h, axis=0, keepdims=True)
    var = jnp.mean((h - mean) ** 2, axis=0, keepdims=True)
    hn = (h - mean) / jnp.sqrt(var + 1e-5)
    out = jnp.maximum(hn * gamma + beta, 0.0)
    return jnp.concatenate([out, x], axis=1)


if __name__ == "__main__":
    # Small shapes consistent with Residual(i, o): batch=8, i=32, o=64
    B, I, O = 8, 32, 64
    key = jax.random.PRNGKey(0)
    kx, kw, kb, kg, kbe = jax.random.split(key, 5)

    x = jax.random.normal(kx, (B, I), dtype=jnp.float32)

    # torch.nn.Linear-style init: U(-1/sqrt(I), 1/sqrt(I))
    bound = 1.0 / jnp.sqrt(jnp.float32(I))
    w = jax.random.uniform(kw, (I, O), minval=-bound, maxval=bound,
                           dtype=jnp.float32)
    b = jax.random.uniform(kb, (O,), minval=-bound, maxval=bound,
                           dtype=jnp.float32)
    # Non-default BN affine params to exercise the fused scale/shift path.
    gamma = jax.random.uniform(kg, (O,), minval=0.5, maxval=1.5,
                               dtype=jnp.float32)
    beta = 0.1 * jax.random.normal(kbe, (O,), dtype=jnp.float32)

    y = residual_forward(x, w, b, gamma, beta)
    y = jax.block_until_ready(y)

    y_ref = _reference_forward(x, w, b, gamma, beta)
    assert y.shape == (B, O + I), y.shape
    assert jnp.allclose(y, y_ref, atol=1e-4, rtol=1e-4), \
        float(jnp.max(jnp.abs(y - y_ref)))

    print("KERNEL_OK")
</pallas_src>

<mosaic_0001>
module attributes {stable_mosaic.version = 11 : i64} {
  func.func @_residual_kernel(%arg0: i32, %arg1: memref<8x32xf32, #tpu.memory_space<vmem>>, %arg2: memref<32x96xf32, #tpu.memory_space<vmem>>, %arg3: memref<1x96xf32, #tpu.memory_space<vmem>>, %arg4: memref<1x96xf32, #tpu.memory_space<vmem>>, %arg5: memref<8x96xf32, #tpu.memory_space<vmem>>) attributes {dimension_semantics = [#tpu.dimension_semantics<parallel>], iteration_bounds = array<i64: 1>, scalar_prefetch = 0 : i64, scratch_operands = 0 : i64, tpu.core_type = #tpu.core_type<tc>, window_params = [{pipeline_mode = #tpu.pipeline_mode<synchronous>, transform_indices = @transform_0, window_bounds = array<i64: 8, 32>}, {transform_indices = @transform_1, window_bounds = array<i64: 32, 96>}, {transform_indices = @transform_2, window_bounds = array<i64: 1, 96>}, {transform_indices = @transform_3, window_bounds = array<i64: 1, 96>}, {transform_indices = @transform_4, window_bounds = array<i64: 8, 96>}]} {
    %c0 = arith.constant 0 : index
    %c0_0 = arith.constant 0 : index
    %0 = vector.load %arg1[%c0, %c0_0] : memref<8x32xf32, #tpu.memory_space<vmem>>, vector<8x32xf32>
    %c0_1 = arith.constant 0 : index
    %c0_2 = arith.constant 0 : index
    %1 = vector.load %arg2[%c0_1, %c0_2] : memref<32x96xf32, #tpu.memory_space<vmem>>, vector<32x96xf32>
    %cst = arith.constant dense<0.000000e+00> : vector<8x96xf32>
    %2 = tpu.matmul %0, %1, %cst {dimension_numbers = #tpu.dot_dimension_numbers<[1], [0], [0], [1], [0, 0, 1, 1], [], []>} : vector<8x32xf32>, vector<32x96xf32>, vector<8x96xf32> -> vector<8x96xf32>
    %cst_3 = arith.constant dense<0.000000e+00> : vector<96xf32>
    %3 = vector.multi_reduction <add>, %2, %cst_3 [0] : vector<8x96xf32> to vector<96xf32>
    %4 = vector.shape_cast %3 : vector<96xf32> to vector<1x96xf32>
    %cst_4 = arith.constant 1.250000e-01 : f32
    %5 = vector.broadcast %cst_4 : f32 to vector<1x96xf32>
    %6 = arith.mulf %4, %5 : vector<1x96xf32>
    %7 = arith.mulf %2, %2 : vector<8x96xf32>
    %cst_5 = arith.constant dense<0.000000e+00> : vector<96xf32>
    %8 = vector.multi_reduction <add>, %7, %cst_5 [0] : vector<8x96xf32> to vector<96xf32>
    %9 = vector.shape_cast %8 : vector<96xf32> to vector<1x96xf32>
    %cst_6 = arith.constant 1.250000e-01 : f32
    %10 = vector.broadcast %cst_6 : f32 to vector<1x96xf32>
    %11 = arith.mulf %9, %10 : vector<1x96xf32>
    %12 = arith.mulf %6, %6 : vector<1x96xf32>
    %13 = arith.subf %11, %12 : vector<1x96xf32>
    %cst_7 = arith.constant 0.000000e+00 : f32
    %14 = vector.broadcast %cst_7 : f32 to vector<1x96xf32>
    %15 = arith.maximumf %13, %14 : vector<1x96xf32>
    %cst_8 = arith.constant 9.99999974E-6 : f32
    %16 = vector.broadcast %cst_8 : f32 to vector<1x96xf32>
    %17 = arith.addf %15, %16 : vector<1x96xf32>
    %18 = math.rsqrt %17 : vector<1x96xf32>
    %c0_9 = arith.constant 0 : index
    %c0_10 = arith.constant 0 : index
    %19 = vector.load %arg3[%c0_9, %c0_10] : memref<1x96xf32, #tpu.memory_space<vmem>>, vector<1x96xf32>
    %20 = arith.mulf %19, %18 : vector<1x96xf32>
    %c0_11 = arith.constant 0 : index
    %c0_12 = arith.constant 0 : index
    %21 = vector.load %arg4[%c0_11, %c0_12] : memref<1x96xf32, #tpu.memory_space<vmem>>, vector<1x96xf32>
    %22 = arith.mulf %6, %20 : vector<1x96xf32>
    %23 = arith.subf %21, %22 : vector<1x96xf32>
    %24 = vector.broadcast %20 : vector<1x96xf32> to vector<8x96xf32>
    %25 = arith.mulf %2, %24 : vector<8x96xf32>
    %26 = vector.broadcast %23 : vector<1x96xf32> to vector<8x96xf32>
    %27 = arith.addf %25, %26 : vector<8x96xf32>
    %c96_i32 = arith.constant 96 : i32
    %28 = arith.muli %arg0, %c96_i32 : i32
    %29 = tpu.iota {dimensions = array<i32: 1>} : vector<8x96xi32>
    %30 = vector.broadcast %28 : i32 to vector<8x96xi32>
    %31 = arith.addi %30, %29 : vector<8x96xi32>
    %c64_i32 = arith.constant 64 : i32
    %32 = vector.broadcast %c64_i32 : i32 to vector<8x96xi32>
    %33 = arith.cmpi slt, %31, %32 : vector<8x96xi32>
    %cst_13 = arith.constant 0.000000e+00 : f32
    %34 = vector.broadcast %cst_13 : f32 to vector<8x96xf32>
    %35 = arith.maximumf %27, %34 : vector<8x96xf32>
    %36 = arith.select %33, %35, %2 : vector<8x96xi1>, vector<8x96xf32>
    %c0_14 = arith.constant 0 : index
    %c0_15 = arith.constant 0 : index
    %37 = vector.load %arg5[%c0_14, %c0_15] : memref<8x96xf32, #tpu.memory_space<vmem>>, vector<8x96xf32>
    tpu.vector_store %arg5[%c0_14, %c0_15], %36 {strides = array<i32>} : memref<8x96xf32, #tpu.memory_space<vmem>>, vector<8x96xf32>,
    return
  }
  func.func @transform_0(%arg0: i32) -> (i32, i32) {
    %c0_i32 = arith.constant 0 : i32
    %c0_i32_0 = arith.constant 0 : i32
    %c0_i32_1 = arith.constant 0 : i32
    return %c0_i32, %c0_i32_0 : i32, i32
  }
  func.func @transform_1(%arg0: i32) -> (i32, i32) {
    %c0_i32 = arith.constant 0 : i32
    %c0_i32_0 = arith.constant 0 : i32
    return %c0_i32, %arg0 : i32, i32
  }
  func.func @transform_2(%arg0: i32) -> (i32, i32) {
    %c0_i32 = arith.constant 0 : i32
    %c0_i32_0 = arith.constant 0 : i32
    return %c0_i32, %arg0 : i32, i32
  }
  func.func @transform_3(%arg0: i32) -> (i32, i32) {
    %c0_i32 = arith.constant 0 : i32
    %c0_i32_0 = arith.constant 0 : i32
    return %c0_i32, %arg0 : i32, i32
  }
  func.func @transform_4(%arg0: i32) -> (i32, i32) {
    %c0_i32 = arith.constant 0 : i32
    %c0_i32_0 = arith.constant 0 : i32
    return %c0_i32, %arg0 : i32, i32
  }
}

</mosaic_0001>

<llo_original>
// kernel: tpu_custom_call.1
$region0: #{tpu_custom_call.1}
  #allocation0 [shape = 'u32[]', space=smem, size = 0x4, offset = 0x4, fixed_abs, tag = 'smem constant byte address 0x4 - core index']
  #allocation1 [shape = 'u32[144,128]{1,0:T(1,128)}', space=vmem, size = 0x12000, scoped, tag = 'internal scratch']
  %s0 = inlined_call_operand.hbm [shape: f32[8,32], index: 0, kind: input, shape index: {}]
  %s1 = inlined_call_operand.hbm [shape: f32[32,96], index: 1, kind: input, shape index: {}]
  %s2 = inlined_call_operand.vmem [shape: f32[1,96], index: 2, kind: input, shape index: {}]
  %s3 = inlined_call_operand.vmem [shape: f32[1,96], index: 3, kind: input, shape index: {}]
  %s4 = inlined_call_operand.hbm [shape: f32[8,96], index: 4, kind: output, shape index: {}]
  %s5 = sld [smem:[#allocation0]]
  $region34: #{tpu_custom_call.1} parent=0
    _
  %s7 = ssub.s32 1, %s5
  %s8 = scalar_select 0, %s7, %s5
  $region1: #{tpu_custom_call.1} parent=0
    #allocation2 [shape = 'u8[4096]{0}', space=vmem, size = 0x1000, scoped, tag = 'input window, operand 0, single buffered']
    #allocation3 [shape = 's32[1]{0}', space=sflag, size = 0x4, scoped, tag = 'scoped memory for tpu_custom_call.1']
    #allocation4 [shape = 's32[1]{0}', space=sflag, size = 0x4, scoped, tag = 'scoped memory for tpu_custom_call.1']
    #allocation5 [shape = 'u8[16384]{0}', space=vmem, size = 0x4000, scoped, tag = 'input window, operand 1, single buffered']
    #allocation6 [shape = 's32[1]{0}', space=sflag, size = 0x4, scoped, tag = 'scoped memory for tpu_custom_call.1']
    #allocation7 [shape = 'u8[4096]{0}', space=vmem, size = 0x1000, scoped, tag = 'output window, operand 0, single buffered']
    %9 = vsyncpa [#allocation3], 0
    %10 = vsyncpa [#allocation6], 0
    %11 = vsyncpa [#allocation4], 0
    // Predicated region
    $region2: #{tpu_custom_call.1} parent=1 // pred_check
      _
    $region3: #{tpu_custom_call.1} parent=1 // pred_check_branch
      %13 = sbr.rel (0) target = $region5
    $region4: #{tpu_custom_call.1} parent=1 // pred_region
      %s15 = ssub.s32 128, 128
      %16 = vsyncadd [#allocation3], %s15
      %s18 = sshll.u32 [#allocation2], 4
      %s19 = int_to_ptr.vmem [resolvable:$true] %s18
      %21 = dma.hbm_to_vmem [thread:$0]  %s0, 128, %s19, [#allocation3]
    $region5: #{tpu_custom_call.1} parent=1 // pred_fallthru
      _
    // Predicated region
    $region6: #{tpu_custom_call.1} parent=1 // pred_check
      _
    $region7: #{tpu_custom_call.1} parent=1 // pred_check_branch
      %23 = sbr.rel (0) target = $region9
    $region8: #{tpu_custom_call.1} parent=1 // pred_region
      %s25 = ssub.s32 512, 512
      %26 = vsyncadd [#allocation6], %s25
      %s27 = sshll.u32 [#allocation5], 4
      %s28 = int_to_ptr.vmem [resolvable:$true] %s27
      %33 = dma.hbm_to_vmem [thread:$0]  %s1, 512, %s28, [#allocation6], 128, 128, 8
    $region9: #{tpu_custom_call.1} parent=1 // pred_fallthru
      _
    // Predicated region
    $region10: #{tpu_custom_call.1} parent=1 // pred_check
      _
    $region11: #{tpu_custom_call.1} parent=1 // pred_check_branch
      %35 = sbr.rel (0) target = $region13
    $region12: #{tpu_custom_call.1} parent=1 // pred_region
      _
    $region13: #{tpu_custom_call.1} parent=1 // pred_fallthru
      _
    // Predicated region
    $region14: #{tpu_custom_call.1} parent=1 // pred_check
      _
    $region15: #{tpu_custom_call.1} parent=1 // pred_check_branch
      %37 = sbr.rel (0) target = $region17
    $region16: #{tpu_custom_call.1} parent=1 // pred_region
      _
    $region17: #{tpu_custom_call.1} parent=1 // pred_fallthru
      _
    // Predicated region
    $region18: #{tpu_custom_call.1} parent=1 // pred_check
      _
    $region19: #{tpu_custom_call.1} parent=1 // pred_check_branch
      %39 = sbr.rel (0) target = $region21
    $region20: #{tpu_custom_call.1} parent=1 // pred_region
      %40 = dma.done [#allocation3], 128
    $region21: #{tpu_custom_call.1} parent=1 // pred_fallthru
      _
    // Predicated region
    $region22: #{tpu_custom_call.1} parent=1 // pred_check
      _
    $region23: #{tpu_custom_call.1} parent=1 // pred_check_branch
      %42 = sbr.rel (0) target = $region25
    $region24: #{tpu_custom_call.1} parent=1 // pred_region
      %43 = dma.done [#allocation6], 512
    $region25: #{tpu_custom_call.1} parent=1 // pred_fallthru
      _
    %v44 = vld [vmem:[#allocation2] sm:$0xff]
    %v45 = vld [vmem:[#allocation5] sm:$0xff]
    %v46 = vld [vmem:[#allocation5 + $0x8] sm:$0xff]
    %v47 = vld [vmem:[#allocation5 + $0x10] sm:$0xff]
    %v48 = vld [vmem:[#allocation5 + $0x18] sm:$0xff]
    %vm49 = vcmask 261120
    %v51 = vsel %vm49, %v44, 0
    %53 = vmatprep.subr.mxu0 0.0
    %54 = vmatpush1.msra.mxu0 0.0
    %55 = vmatprep.subr.mxu0 0.0
    %56 = vmatpush1.msra.mxu0 0.0
    %57 = vmatprep.subr.mxu0 0.0
    %58 = vmatpush1.msra.mxu0 0.0
    %59 = vmatprep.subr.mxu0 0.0
    %60 = vmatpush1.msra.mxu0 0.0
    %61 = vmatprep.subr.mxu0 0.0
    %62 = vmatpush1.msra.mxu0 0.0
    %63 = vmatprep.subr.mxu0 0.0
    %64 = vmatpush1.msra.mxu0 0.0
    %65 = vmatprep.subr.mxu0 0.0
    %66 = vmatpush1.msra.mxu0 0.0
    %67 = vmatprep.subr.mxu0 0.0
    %68 = vmatpush1.msra.mxu0 0.0
    %69 = vmatprep.subr.mxu0 0.0
    %70 = vmatpush1.msra.mxu0 0.0
    %71 = vmatprep.subr.mxu0 0.0
    %72 = vmatpush1.msra.mxu0 0.0
    %73 = vmatprep.subr.mxu0 0.0
    %74 = vmatpush1.msra.mxu0 0.0
    %75 = vmatprep.subr.mxu0 0.0
    %76 = vmatpush1.msra.mxu0 0.0
    %77 = vmatprep.subr.mxu0 0.0
    %78 = vmatpush1.msra.mxu0 %v48
    %79 = vmatprep.subr.mxu0 0.0
    %80 = vmatpush1.msra.mxu0 %v47
    %81 = vmatprep.subr.mxu0 0.0
    %82 = vmatpush1.msra.mxu0 %v46
    %83 = vmatprep.subr.mxu0 0.0
    %84 = vmatpush1.msra.mxu0 %v45
    %85 = vmatprep.subr.mxu0 0.0
    %86 = vmatpush2.msra.mxu0 0.0
    %87 = vmatprep.subr.mxu0 0.0
    %88 = vmatpush2.msra.mxu0 0.0
    %89 = vmatprep.subr.mxu0 0.0
    %90 = vmatpush2.msra.mxu0 0.0
    %91 = vmatprep.subr.mxu0 0.0
    %92 = vmatpush2.msra.mxu0 0.0
    %93 = vmatprep.subr.mxu0 0.0
    %94 = vmatpush2.msra.mxu0 0.0
    %95 = vmatprep.subr.mxu0 0.0
    %96 = vmatpush2.msra.mxu0 0.0
    %97 = vmatprep.subr.mxu0 0.0
    %98 = vmatpush2.msra.mxu0 0.0
    %99 = vmatprep.subr.mxu0 0.0
    %100 = vmatpush2.msra.mxu0 0.0
    %101 = vmatprep.subr.mxu0 0.0
    %102 = vmatpush2.msra.mxu0 0.0
    %103 = vmatprep.subr.mxu0 0.0
    %104 = vmatpush2.msra.mxu0 0.0
    %105 = vmatprep.subr.mxu0 0.0
    %106 = vmatpush2.msra.mxu0 0.0
    %107 = vmatprep.subr.mxu0 0.0
    %108 = vmatpush2.msra.mxu0 0.0
    %109 = vmatprep.subr.mxu0 0.0
    %110 = vmatpush2.msra.mxu0 0.0
    %111 = vmatprep.subr.mxu0 0.0
    %112 = vmatpush2.msra.mxu0 0.0
    %113 = vmatprep.subr.mxu0 0.0
    %114 = vmatpush2.msra.mxu0 0.0
    %115 = vmatprep.subr.mxu0 0.0
    %116 = vmatpush2.msra.mxu0 0.0
    %117 = vmatprep.mubr.f32.mxu0 0.0
    %118 = vmatmul.mubr.f32.gmra.mxu0 %v51
    %v119 = vpop.f32.mrf.mxu0
    %v120 = vadd.f32 0.0, %v119
    %v121 = vpop.f32.mrf.mxu0
    %122 = vdwg.mxu0
    %vm123 = vcmask 785408
    %v124 = vsel %vm123, %v120, 0.0
    %v125 = vrot.slane %v124, 4
    %v126 = vadd.f32 %v124, %v125
    %v127 = vrot.slane %v126, 2
    %v128 = vadd.f32 %v126, %v127
    %v129 = vrot.slane %v128, 1
    %v130 = vadd.f32 %v128, %v129
    %v131 = vmul.f32 %v130, 0.125
    %v132 = vmul.f32 %v120, %v120
    %v133 = vsel %vm123, %v132, 0.0
    %v134 = vrot.slane %v133, 4
    %v135 = vadd.f32 %v133, %v134
    %v136 = vrot.slane %v135, 2
    %v137 = vadd.f32 %v135, %v136
    %v138 = vrot.slane %v137, 1
    %v139 = vadd.f32 %v137, %v138
    %v140 = vmul.f32 %v139, 0.125
    %v141 = vmul.f32 %v131, %v131
    %v142 = vsub.f32 %v140, %v141
    %v143 = vmax.f32 %v142, 0.0
    %v144 = vadd.f32 %v143, 1e-05
    %v145 = vrsqrt.pop %v144
    %v146 = vld [vmem:[%s2] sm:$0x1]
    %v147 = vmul.f32 %v146, %v145
    %v148 = vld [vmem:[%s3] sm:$0x1]
    %v149 = vmul.f32 %v131, %v147
    %v150 = vsub.f32 %v148, %v149
    %v152 = vlaneseq
    %v153 = vshrl.u32 %v152, 7
    %v154 = vsub.s32 0, %v153
    %v155 = vrot.slane %v147, %v154
    %v157 = vmul.f32 %v120, %v155
    %v159 = vlaneseq
    %v160 = vshrl.u32 %v159, 7
    %v161 = vsub.s32 0, %v160
    %v162 = vrot.slane %v150, %v161
    %v164 = vadd.f32 %v157, %v162
    %s165 = smul.u32 0, 96
    %v166 = vlaneseq
    %v167 = vand.u32 %v166, 127
    %v168 = vstv %s165
    %v169 = vadd.s32 %v168, %v167
    %vm170 = vcmp.lt.s32.totalorder %v169, 64
    %v171 = vmax.f32 %v164, 0.0
    %v172 = vsel %vm170, %v171, %v120
    %173 = vst.msk [vmem:[#allocation7] sm:$0xff] %vm123, %v172
    // Predicated region
    $region26: #{tpu_custom_call.1} parent=1 // pred_check
      _
    $region27: #{tpu_custom_call.1} parent=1 // pred_check_branch
      %175 = sbr.rel (0) target = $region29
    $region28: #{tpu_custom_call.1} parent=1 // pred_region
      %s177 = ssub.s32 128, 128
      %178 = vsyncadd [#allocation4], %s177
      %s180 = sshll.u32 [#allocation7], 4
      %s181 = int_to_ptr.vmem [resolvable:$true] %s180
      %183 = dma.vmem_to_hbm [thread:$0]  %s181, 128, %s4, [#allocation4]
    $region29: #{tpu_custom_call.1} parent=1 // pred_fallthru
      _
    // Predicated region
    $region30: #{tpu_custom_call.1} parent=1 // pred_check
      _
    $region31: #{tpu_custom_call.1} parent=1 // pred_check_branch
      %185 = sbr.rel (0) target = $region33
    $region32: #{tpu_custom_call.1} parent=1 // pred_region
      %186 = dma.done [#allocation4], 128
    $region33: #{tpu_custom_call.1} parent=1 // pred_fallthru
      _
    %187 = vsyncpa [#allocation3], 1
    %188 = vsyncpa [#allocation6], 1
    %189 = vsyncpa [#allocation4], 1

</llo_original>
